<compile_context>
chip_gen: v6e
topology: v6e:2x2x1
jax: 0.10.0
libtpu: 0.0.40
codegen_flags: <defaults>
</compile_context>

<pallas_src>
import functools

import jax
import jax.numpy as jnp
from jax.experimental import pallas as pl
from jax.experimental.pallas import tpu as pltpu

CHANNELS = 4
FILTERS = 240
FILTERS_PAD = 256                    # lane-dense output / full-width MXU N dim
KSIZE = 20
KC = KSIZE * CHANNELS                # 80 = im2col contraction depth
POOL = 15                            # maxpool kernel == stride == 15
PAD_LEFT = (KSIZE - 1) // 2          # 9  (PyTorch padding='same', even kernel)
PAD_RIGHT = (KSIZE - 1) - PAD_LEFT   # 10


def _tfcnn_kernel(cols_ref, w_ref, b_ref, o_ref, *, bn, length, l_out):
    # cols_ref: (Bn, L, K*C)  w_ref: (K*C, Fp)  b_ref: (1, Fp)  o_ref: (Bn, L_out, Fp)
    lhs = cols_ref[...].reshape(bn * length, KC)        # fold batch into MXU M dim
    y = jnp.dot(lhs, w_ref[...], preferred_element_type=jnp.float32)
    y = jnp.maximum(y + b_ref[...], 0.0)                # bias + ReLU

    # MaxPool1d(POOL, POOL): vectorized sublane reduction + one bulk store.
    y = y.reshape(bn, length, FILTERS_PAD)[:, :l_out * POOL, :]
    pooled = jnp.max(y.reshape(bn * l_out, POOL, FILTERS_PAD), axis=1)
    o_ref[...] = pooled.reshape(bn, l_out, FILTERS_PAD)


def _pick_batch_block(n, length):
    """Batch items per grid step: fill the MXU M dim (~256 rows) but keep
    >= 2 grid steps when the batch allows (v7x has 2 TensorCores)."""
    bn = max(1, min(n, -(-256 // length)))              # cdiv(256, length)
    if n >= 2:
        bn = min(bn, max(1, n // 2))
    while n % bn:                                       # uniform blocks
        bn -= 1
    return bn


@jax.jit
def tfcnn_forward(x, w, b):
    """x: (N, C, L) f32 (PyTorch NCL); w: (F, C, K) f32; b: (F,) f32.
    Returns (N, F, L_out) f32, matching Conv1d('same') + ReLU + MaxPool1d(15,15)."""
    n, c, length = x.shape
    l_out = (length - POOL) // POOL + 1
    bn = _pick_batch_block(n, length)

    # Wrapper glue (fused by XLA): 'same' pad + im2col patches, k-major then c.
    xp = jnp.transpose(jnp.pad(x, ((0, 0), (0, 0), (PAD_LEFT, PAD_RIGHT))),
                       (0, 2, 1))                                   # (N, L_pad, C)
    cols = jnp.stack([xp[:, k:k + length, :] for k in range(KSIZE)],
                     axis=2).reshape(n, length, KC)                 # (N, L, K*C)

    # Weights -> (K*C, F) matching cols' [k, c] ordering; pad F 240 -> 256.
    wk = jnp.transpose(w, (2, 1, 0)).reshape(KC, FILTERS)
    wk = jnp.pad(wk, ((0, 0), (0, FILTERS_PAD - FILTERS)))
    b2 = jnp.pad(b, (0, FILTERS_PAD - FILTERS)).reshape(1, FILTERS_PAD)

    kernel = functools.partial(_tfcnn_kernel, bn=bn, length=length, l_out=l_out)

    out = pl.pallas_call(
        kernel,
        out_shape=jax.ShapeDtypeStruct((n, l_out, FILTERS_PAD), jnp.float32),
        grid_spec=pltpu.PrefetchScalarGridSpec(
            num_scalar_prefetch=0,
            grid=(n // bn,),
            in_specs=[
                pl.BlockSpec((bn, length, KC), lambda i: (i, 0, 0)),
                # Grid-invariant weight / bias tiles.
                pl.BlockSpec((KC, FILTERS_PAD), lambda i: (0, 0)),
                pl.BlockSpec((1, FILTERS_PAD), lambda i: (0, 0)),
            ],
            out_specs=pl.BlockSpec((bn, l_out, FILTERS_PAD), lambda i: (i, 0, 0)),
        ),
        compiler_params=pltpu.CompilerParams(
            dimension_semantics=("parallel",)),
    )(cols, wk, b2)

    # Drop the filter padding, return PyTorch layout (N, F, L_out).
    return jnp.transpose(out[:, :, :FILTERS], (0, 2, 1))


def tfcnn_reference(x, w, b):
    """Pure-JAX reference of the PyTorch forward, for correctness checking."""
    n, c, length = x.shape
    xp = jnp.pad(x, ((0, 0), (0, 0), (PAD_LEFT, PAD_RIGHT)))
    cols = jnp.stack([xp[:, :, k:k + length] for k in range(KSIZE)], axis=-1)  # (N,C,L,K)
    y = jnp.einsum('nclk,fck->nfl', cols, w) + b[None, :, None]
    y = jnp.maximum(y, 0.0)
    l_out = (length - POOL) // POOL + 1
    return y[:, :, :l_out * POOL].reshape(n, FILTERS, l_out, POOL).max(axis=-1)


if __name__ == "__main__":
    key = jax.random.PRNGKey(0)
    kx, kw, kb = jax.random.split(key, 3)

    N, L = 2, 60                                        # small shapes: (2, 4, 60)
    x = jax.random.normal(kx, (N, CHANNELS, L), jnp.float32)

    # Deterministic Conv1d-style init (uniform(-1/sqrt(fan_in), +...)).
    fan_in = CHANNELS * KSIZE
    bound = float(1.0 / (fan_in ** 0.5))
    w = jax.random.uniform(kw, (FILTERS, CHANNELS, KSIZE), jnp.float32, -bound, bound)
    b = jax.random.uniform(kb, (FILTERS,), jnp.float32, -bound, bound)

    out = jax.block_until_ready(tfcnn_forward(x, w, b))
    ref = tfcnn_reference(x, w, b)

    assert out.shape == (N, FILTERS, (L - POOL) // POOL + 1), out.shape
    assert jnp.allclose(out, ref, atol=1e-4, rtol=1e-4), "mismatch vs reference"
    print("KERNEL_OK")
</pallas_src>

<mosaic_0001>
module attributes {stable_mosaic.version = 11 : i64} {
  func.func @_tfcnn_kernel(%arg0: i32, %arg1: memref<1x60x80xf32, #tpu.memory_space<vmem>>, %arg2: memref<80x256xf32, #tpu.memory_space<vmem>>, %arg3: memref<1x256xf32, #tpu.memory_space<vmem>>, %arg4: memref<1x4x256xf32, #tpu.memory_space<vmem>>) attributes {dimension_semantics = [#tpu.dimension_semantics<parallel>], iteration_bounds = array<i64: 2>, scalar_prefetch = 0 : i64, scratch_operands = 0 : i64, tpu.core_type = #tpu.core_type<tc>, window_params = [{transform_indices = @transform_0, window_bounds = array<i64: 1, 60, 80>}, {pipeline_mode = #tpu.pipeline_mode<synchronous>, transform_indices = @transform_1, window_bounds = array<i64: 80, 256>}, {pipeline_mode = #tpu.pipeline_mode<synchronous>, transform_indices = @transform_2, window_bounds = array<i64: 1, 256>}, {transform_indices = @transform_3, window_bounds = array<i64: 1, 4, 256>}]} {
    %c0 = arith.constant 0 : index
    %c0_0 = arith.constant 0 : index
    %c0_1 = arith.constant 0 : index
    %0 = vector.load %arg1[%c0, %c0_0, %c0_1] : memref<1x60x80xf32, #tpu.memory_space<vmem>>, vector<1x60x80xf32>
    %1 = vector.shape_cast %0 : vector<1x60x80xf32> to vector<60x80xf32>
    %c0_2 = arith.constant 0 : index
    %c0_3 = arith.constant 0 : index
    %2 = vector.load %arg2[%c0_2, %c0_3] : memref<80x256xf32, #tpu.memory_space<vmem>>, vector<80x256xf32>
    %cst = arith.constant dense<0.000000e+00> : vector<60x256xf32>
    %3 = tpu.matmul %1, %2, %cst {dimension_numbers = #tpu.dot_dimension_numbers<[1], [0], [0], [1], [0, 0, 1, 1], [], []>} : vector<60x80xf32>, vector<80x256xf32>, vector<60x256xf32> -> vector<60x256xf32>
    %c0_4 = arith.constant 0 : index
    %c0_5 = arith.constant 0 : index
    %4 = vector.load %arg3[%c0_4, %c0_5] : memref<1x256xf32, #tpu.memory_space<vmem>>, vector<1x256xf32>
    %5 = vector.broadcast %4 : vector<1x256xf32> to vector<60x256xf32>
    %6 = arith.addf %3, %5 : vector<60x256xf32>
    %cst_6 = arith.constant 0.000000e+00 : f32
    %7 = vector.broadcast %cst_6 : f32 to vector<60x256xf32>
    %8 = arith.maximumf %6, %7 : vector<60x256xf32>
    %9 = vector.shape_cast %8 : vector<60x256xf32> to vector<1x60x256xf32>
    %10 = vector.shape_cast %9 : vector<1x60x256xf32> to vector<4x15x256xf32>
    %cst_7 = arith.constant dense<0xFF800000> : vector<4x256xf32>
    %11 = vector.multi_reduction <maximumf>, %10, %cst_7 [1] : vector<4x15x256xf32> to vector<4x256xf32>
    %12 = vector.shape_cast %11 : vector<4x256xf32> to vector<1x4x256xf32>
    %c0_8 = arith.constant 0 : index
    %c0_9 = arith.constant 0 : index
    %c0_10 = arith.constant 0 : index
    %13 = vector.load %arg4[%c0_8, %c0_9, %c0_10] : memref<1x4x256xf32, #tpu.memory_space<vmem>>, vector<1x4x256xf32>
    tpu.vector_store %arg4[%c0_8, %c0_9, %c0_10], %12 {strides = array<i32>} : memref<1x4x256xf32, #tpu.memory_space<vmem>>, vector<1x4x256xf32>,
    return
  }
  func.func @transform_0(%arg0: i32) -> (i32, i32, i32) {
    %c0_i32 = arith.constant 0 : i32
    %c0_i32_0 = arith.constant 0 : i32
    %c0_i32_1 = arith.constant 0 : i32
    return %arg0, %c0_i32, %c0_i32_0 : i32, i32, i32
  }
  func.func @transform_1(%arg0: i32) -> (i32, i32) {
    %c0_i32 = arith.constant 0 : i32
    %c0_i32_0 = arith.constant 0 : i32
    %c0_i32_1 = arith.constant 0 : i32
    return %c0_i32, %c0_i32_0 : i32, i32
  }
  func.func @transform_2(%arg0: i32) -> (i32, i32) {
    %c0_i32 = arith.constant 0 : i32
    %c0_i32_0 = arith.constant 0 : i32
    %c0_i32_1 = arith.constant 0 : i32
    return %c0_i32, %c0_i32_0 : i32, i32
  }
  func.func @transform_3(%arg0: i32) -> (i32, i32, i32) {
    %c0_i32 = arith.constant 0 : i32
    %c0_i32_0 = arith.constant 0 : i32
    %c0_i32_1 = arith.constant 0 : i32
    return %arg0, %c0_i32, %c0_i32_0 : i32, i32, i32
  }
}

</mosaic_0001>

<llo_original>
// kernel: tfcnn_forward.1
$region0: #{tfcnn_forward.1}
  #allocation0 [shape = 'u32[]', space=smem, size = 0x4, offset = 0x4, fixed_abs, tag = 'smem constant byte address 0x4 - core index']
  #allocation1 [shape = 'u32[144,128]{1,0:T(1,128)}', space=vmem, size = 0x12000, scoped, tag = 'internal scratch']
  %s0 = inlined_call_operand.vmem [shape: f32[2,60,80], index: 0, kind: input, shape index: {}]
  %s1 = inlined_call_operand.vmem [shape: f32[80,256], index: 1, kind: input, shape index: {}]
  %s2 = inlined_call_operand.vmem [shape: f32[1,256], index: 2, kind: input, shape index: {}]
  %s3 = inlined_call_operand.vmem [shape: f32[2,4,256], index: 3, kind: output, shape index: {}]
  %s4 = sld [smem:[#allocation0]]
  $region45: #{tfcnn_forward.1} parent=0
    _
  %s6 = ssub.s32 1, %s4
  %s7 = scalar_select 0, %s6, %s4
  loop: start=0, step=1, limit=4
  $region2: #{tfcnn_forward.1} parent=0 // loop_pre_header
    _
  $region3: #{tfcnn_forward.1} parent=0 // loop_header
    %s9 = sphi 0, %s13
    %p10 = scmp.ge.s32.totalorder %s9, 4
    %s19 = sphi 0, %s21
    %s22 = sphi 0, %s19
    %s23 = sphi 0, %s22
    %s39 = sphi 0, %s23
    %s43 = sphi 0, %s43
    %s45 = sphi 0, %s43
    %s46 = sphi 0, %s45
    %s60 = sphi 0, %s46
    %s64 = sphi 0, %s64
    %s66 = sphi 0, %s64
    %s67 = sphi 0, %s66
    %s81 = sphi 0, %s67
    %s87 = sphi 0, %s89
    %s90 = sphi 0, %s87
    %s91 = sphi 0, %s90
    %s107 = sphi 0, %s91
  $region4: #{tfcnn_forward.1} parent=0 // loop_header_branch
    %12 = sbr.rel (%p10) target = $region8
  $region5: #{tfcnn_forward.1} parent=0 // loop_body
    %s14 = ssub.s32 %s9, 1
    %s15 = ssub.s32 %s9, 2
    %s16 = sadd.s32 %s9, 1
    %s17 = ssub.s32 %s9, %s16
    %p18 = scmp.eq.s32.totalorder %s17, 0
    %s20 = sadd.s32 %s19, 1
    %s21 = scalar_select %p18, %s19, %s20
    %p24 = pneg %p18
    %p25 = scmp.eq.s32.totalorder %s9, 1
    %p26 = por %p24, %p25
    %p27 = scmp.ne.s32.totalorder %s19, %s22
    %p28 = scmp.eq.s32.totalorder %s9, 0
    %p29 = por %p27, %p28
    %p30 = scmp.ne.s32.totalorder %s19, %s22
    %p31 = scmp.eq.s32.totalorder %s14, 1
    %p32 = por %p30, %p31
    %p33 = scmp.ne.s32.totalorder %s22, %s23
    %p34 = scmp.eq.s32.totalorder %s14, 0
    %p35 = por %p33, %p34
    %p36 = scmp.ne.s32.totalorder %s22, %s23
    %p37 = scmp.eq.s32.totalorder %s15, 1
    %p38 = por %p36, %p37
    %p40 = scmp.ne.s32.totalorder %s23, %s39
    %p41 = scmp.eq.s32.totalorder %s15, 0
    %p42 = por %p40, %p41
    %s44 = sadd.s32 %s43, 1
    %p47 = scmp.eq.s32.totalorder %s9, 1
    %p48 = scmp.ne.s32.totalorder %s43, %s45
    %p49 = scmp.eq.s32.totalorder %s9, 0
    %p50 = por %p48, %p49
    %p51 = scmp.ne.s32.totalorder %s43, %s45
    %p52 = scmp.eq.s32.totalorder %s14, 1
    %p53 = por %p51, %p52
    %p54 = scmp.ne.s32.totalorder %s45, %s46
    %p55 = scmp.eq.s32.totalorder %s14, 0
    %p56 = por %p54, %p55
    %p57 = scmp.ne.s32.totalorder %s45, %s46
    %p58 = scmp.eq.s32.totalorder %s15, 1
    %p59 = por %p57, %p58
    %p61 = scmp.ne.s32.totalorder %s46, %s60
    %p62 = scmp.eq.s32.totalorder %s15, 0
    %p63 = por %p61, %p62
    %s65 = sadd.s32 %s64, 1
    %p68 = scmp.eq.s32.totalorder %s9, 1
    %p69 = scmp.ne.s32.totalorder %s64, %s66
    %p70 = scmp.eq.s32.totalorder %s9, 0
    %p71 = por %p69, %p70
    %p72 = scmp.ne.s32.totalorder %s64, %s66
    %p73 = scmp.eq.s32.totalorder %s14, 1
    %p74 = por %p72, %p73
    %p75 = scmp.ne.s32.totalorder %s66, %s67
    %p76 = scmp.eq.s32.totalorder %s14, 0
    %p77 = por %p75, %p76
    %p78 = scmp.ne.s32.totalorder %s66, %s67
    %p79 = scmp.eq.s32.totalorder %s15, 1
    %p80 = por %p78, %p79
    %p82 = scmp.ne.s32.totalorder %s67, %s81
    %p83 = scmp.eq.s32.totalorder %s15, 0
    %p84 = por %p82, %p83
    %s85 = ssub.s32 %s9, %s16
    %p86 = scmp.eq.s32.totalorder %s85, 0
    %s88 = sadd.s32 %s87, 1
    %s89 = scalar_select %p86, %s87, %s88
    %p92 = pneg %p86
    %p93 = scmp.eq.s32.totalorder %s9, 1
    %p94 = por %p92, %p93
    %p95 = scmp.ne.s32.totalorder %s87, %s90
    %p96 = scmp.eq.s32.totalorder %s9, 0
    %p97 = por %p95, %p96
    %p98 = scmp.ne.s32.totalorder %s87, %s90
    %p99 = scmp.eq.s32.totalorder %s14, 1
    %p100 = por %p98, %p99
    %p101 = scmp.ne.s32.totalorder %s90, %s91
    %p102 = scmp.eq.s32.totalorder %s14, 0
    %p103 = por %p101, %p102
    %p104 = scmp.ne.s32.totalorder %s90, %s91
    %p105 = scmp.eq.s32.totalorder %s15, 1
    %p106 = por %p104, %p105
    %p108 = scmp.ne.s32.totalorder %s91, %s107
    %p109 = scmp.eq.s32.totalorder %s15, 0
    %p110 = por %p108, %p109
    %p111 = scmp.le.s32.totalorder 1, %s9
    %p112 = scmp.lt.s32.totalorder %s9, 3
    %p113 = pnand %p111, %p112
    %p114 = pneg %p113
    // Predicated region
    $region9: #{tfcnn_forward.1} parent=5 // pred_check
      _
    $region10: #{tfcnn_forward.1} parent=5 // pred_check_branch
      %116 = sbr.rel (%p113) target = $region12
    $region11: #{tfcnn_forward.1} parent=5 // pred_region
      %s117 = ssub.s32 %s9, 1
      // Predicated region
      $region13: #{tfcnn_forward.1} parent=11 // pred_check
        %p118 = pneg %p56
      $region14: #{tfcnn_forward.1} parent=11 // pred_check_branch
        %120 = sbr.rel (%p118) target = $region16
      $region15: #{tfcnn_forward.1} parent=11 // pred_region
        _
      $region16: #{tfcnn_forward.1} parent=11 // pred_fallthru
        _
      // Predicated region
      $region17: #{tfcnn_forward.1} parent=11 // pred_check
        %p121 = pneg %p77
      $region18: #{tfcnn_forward.1} parent=11 // pred_check_branch
        %123 = sbr.rel (%p121) target = $region20
      $region19: #{tfcnn_forward.1} parent=11 // pred_region
        _
      $region20: #{tfcnn_forward.1} parent=11 // pred_fallthru
        _
    $region12: #{tfcnn_forward.1} parent=5 // pred_fallthru
      _
    %p124 = scmp.lt.s32.totalorder %s9, 2
    // Predicated region
    $region21: #{tfcnn_forward.1} parent=5 // pred_check
      %p125 = pneg %p124
    $region22: #{tfcnn_forward.1} parent=5 // pred_check_branch
      %127 = sbr.rel (%p125) target = $region24
    $region23: #{tfcnn_forward.1} parent=5 // pred_region
      // Predicated region
      $region25: #{tfcnn_forward.1} parent=23 // pred_check
        %p128 = pneg %p29
      $region26: #{tfcnn_forward.1} parent=23 // pred_check_branch
        %130 = sbr.rel (%p128) target = $region28
      $region27: #{tfcnn_forward.1} parent=23 // pred_region
        %p131 = scmp.lt.s32.totalorder %s9, 1
        %s132 = scalar_select %p131, %s9, 1
        %s133 = smul.addr %s132, 8
        %s134 = smul.addr %s133, 8
        %s135 = scalar_lea.vmem %s0, %s134
      $region28: #{tfcnn_forward.1} parent=23 // pred_fallthru
        _
    $region24: #{tfcnn_forward.1} parent=5 // pred_fallthru
      _
    %p136 = scmp.le.s32.totalorder 1, %s9
    %p137 = scmp.lt.s32.totalorder %s9, 3
    %p138 = pnand %p136, %p137
    %p139 = pneg %p138
    // Predicated region
    $region29: #{tfcnn_forward.1} parent=5 // pred_check
      _
    $region30: #{tfcnn_forward.1} parent=5 // pred_check_branch
      %141 = sbr.rel (%p138) target = $region32
    $region31: #{tfcnn_forward.1} parent=5 // pred_region
      %s142 = ssub.s32 %s9, 1
      %p143 = scmp.lt.s32.totalorder %s14, 1
      %s144 = scalar_select %p143, %s14, 1
      %s145 = smul.addr %s144, 8
      %s146 = smul.addr %s145, 8
      %s147 = scalar_lea.vmem %s0, %s146
      %p148 = pneg %p35
      %p149 = pneg %p32
      %p150 = pneg %p56
      %p151 = pneg %p53
      %p152 = pneg %p77
      %p153 = pneg %p74
      %p154 = pneg %p103
      %p155 = pneg %p100
      %p156 = scmp.lt.s32.totalorder %s14, 1
      %s157 = scalar_select %p156, %s14, 1
      %s158 = smul.addr %s157, 2
      %s159 = smul.addr %s158, 4
      %s160 = scalar_lea.vmem %s3, %s159
      %p161 = scmp.lt.s32.totalorder %s14, 1
      %s162 = scalar_select %p161, %s14, 1
      %s163 = smul.addr %s162, 8
      %s164 = smul.addr %s163, 8
      %s165 = scalar_lea.vmem %s0, %s164
      %p166 = scmp.lt.s32.totalorder %s14, 1
      %s167 = scalar_select %p166, %s14, 1
      %s168 = smul.addr %s167, 2
      %s169 = smul.addr %s168, 4
      %s170 = scalar_lea.vmem %s3, %s169
      %v171 = vld [vmem:[%s165] sm:$0xff]
      %v172 = vld [vmem:[%s165 + $0x8] sm:$0xff]
      %v173 = vld [vmem:[%s165 + $0x10] sm:$0xff]
      %v174 = vld [vmem:[%s165 + $0x18] sm:$0xff]
      %v175 = vld [vmem:[%s165 + $0x20] sm:$0xff]
      %v176 = vld [vmem:[%s165 + $0x28] sm:$0xff]
      %v177 = vld [vmem:[%s165 + $0x30] sm:$0xff]
      %v178 = vld [vmem:[%s165 + $0x38] sm:$0xf]
      %v179 = vld [vmem:[%s1] sm:$0xff]
      %v180 = vld [vmem:[%s1 + $0x8] sm:$0xff]
      %v181 = vld [vmem:[%s1 + $0x10] sm:$0xff]
      %v182 = vld [vmem:[%s1 + $0x18] sm:$0xff]
      %v183 = vld [vmem:[%s1 + $0x20] sm:$0xff]
      %v184 = vld [vmem:[%s1 + $0x28] sm:$0xff]
      %v185 = vld [vmem:[%s1 + $0x30] sm:$0xff]
      %v186 = vld [vmem:[%s1 + $0x38] sm:$0xff]
      %v187 = vld [vmem:[%s1 + $0x40] sm:$0xff]
      %v188 = vld [vmem:[%s1 + $0x48] sm:$0xff]
      %v189 = vld [vmem:[%s1 + $0x50] sm:$0xff]
      %v190 = vld [vmem:[%s1 + $0x58] sm:$0xff]
      %v191 = vld [vmem:[%s1 + $0x60] sm:$0xff]
      %v192 = vld [vmem:[%s1 + $0x68] sm:$0xff]
      %v193 = vld [vmem:[%s1 + $0x70] sm:$0xff]
      %v194 = vld [vmem:[%s1 + $0x78] sm:$0xff]
      %v195 = vld [vmem:[%s1 + $0x80] sm:$0xff]
      %v196 = vld [vmem:[%s1 + $0x88] sm:$0xff]
      %v197 = vld [vmem:[%s1 + $0x90] sm:$0xff]
      %v198 = vld [vmem:[%s1 + $0x98] sm:$0xff]
      %v199 = vld [vmem:[%s2] sm:$0x3]
      %v201 = vlaneseq
      %v202 = vshrl.u32 %v201, 7
      %v203 = vsub.s32 0, %v202
      %v204 = vrot.slane %v199, %v203
      %v205 = vlaneseq
      %v206 = vshrl.u32 %v205, 7
      %v207 = vsub.s32 1, %v206
      %v208 = vrot.slane %v199, %v207
      %vm211 = vcmask 654336
      %v213 = vsel %vm211, %v171, 0
      %v216 = vsel %vm211, %v172, 0
      %v219 = vsel %vm211, %v173, 0
      %v222 = vsel %vm211, %v174, 0
      %v225 = vsel %vm211, %v175, 0
      %v228 = vsel %vm211, %v176, 0
      %v231 = vsel %vm211, %v177, 0
      %v234 = vsel %vm211, %v178, 0
      %236 = vmatprep.subr.mxu0 0.0
      %237 = vmatpush1.msra.mxu0 0.0
      %238 = vmatprep.subr.mxu0 0.0
      %239 = vmatpush1.msra.mxu0 0.0
      %240 = vmatprep.subr.mxu0 0.0
      %241 = vmatpush1.msra.mxu0 0.0
      %242 = vmatprep.subr.mxu0 0.0
      %243 = vmatpush1.msra.mxu0 0.0
      %244 = vmatprep.subr.mxu0 0.0
      %245 = vmatpush1.msra.mxu0 0.0
      %246 = vmatprep.subr.mxu0 0.0
      %247 = vmatpush1.msra.mxu0 0.0
      %248 = vmatprep.subr.mxu0 %v198
      %249 = vmatpush1.msra.mxu0 %v197
      %250 = vmatprep.subr.mxu0 %v196
      %251 = vmatpush1.msra.mxu0 %v195
      %252 = vmatprep.subr.mxu0 %v194
      %253 = vmatpush1.msra.mxu0 %v193
      %254 = vmatprep.subr.mxu0 %v192
      %255 = vmatpush1.msra.mxu0 %v191
      %256 = vmatprep.subr.mxu0 %v190
      %257 = vmatpush1.msra.mxu0 %v189
      %258 = vmatprep.subr.mxu0 %v188
      %259 = vmatpush1.msra.mxu0 %v187
      %260 = vmatprep.subr.mxu0 %v186
      %261 = vmatpush1.msra.mxu0 %v185
      %262 = vmatprep.subr.mxu0 %v184
      %263 = vmatpush1.msra.mxu0 %v183
      %264 = vmatprep.subr.mxu0 %v182
      %265 = vmatpush1.msra.mxu0 %v181
      %266 = vmatprep.subr.mxu0 %v180
      %267 = vmatpush1.msra.mxu0 %v179
      %268 = vmatprep.subr.mxu0 0.0
      %269 = vmatpush2.msra.mxu0 0.0
      %270 = vmatprep.subr.mxu0 0.0
      %271 = vmatpush2.msra.mxu0 0.0
      %272 = vmatprep.subr.mxu0 0.0
      %273 = vmatpush2.msra.mxu0 0.0
      %274 = vmatprep.subr.mxu0 0.0
      %275 = vmatpush2.msra.mxu0 0.0
      %276 = vmatprep.subr.mxu0 0.0
      %277 = vmatpush2.msra.mxu0 0.0
      %278 = vmatprep.subr.mxu0 0.0
      %279 = vmatpush2.msra.mxu0 0.0
      %280 = vmatprep.subr.mxu0 0.0
      %281 = vmatpush2.msra.mxu0 0.0
      %282 = vmatprep.subr.mxu0 0.0
      %283 = vmatpush2.msra.mxu0 0.0
      %284 = vmatprep.subr.mxu0 0.0
      %285 = vmatpush2.msra.mxu0 0.0
      %286 = vmatprep.subr.mxu0 0.0
      %287 = vmatpush2.msra.mxu0 0.0
      %288 = vmatprep.subr.mxu0 0.0
      %289 = vmatpush2.msra.mxu0 0.0
      %290 = vmatprep.subr.mxu0 0.0
      %291 = vmatpush2.msra.mxu0 0.0
      %292 = vmatprep.subr.mxu0 0.0
      %293 = vmatpush2.msra.mxu0 0.0
      %294 = vmatprep.subr.mxu0 0.0
      %295 = vmatpush2.msra.mxu0 0.0
      %296 = vmatprep.subr.mxu0 0.0
      %297 = vmatpush2.msra.mxu0 0.0
      %298 = vmatprep.subr.mxu0 0.0
      %299 = vmatpush2.msra.mxu0 0.0
      %300 = vmatprep.mubr.f32.mxu0 0.0
      %301 = vmatmul.mubr.f32.gmra.mxu0 %v213
      %v302 = vpop.f32.mrf.mxu0
      %v303 = vadd.f32 %v204, %v302
      %v304 = vpop.f32.mrf.mxu0
      %v305 = vadd.f32 %v208, %v304
      %306 = vmatprep.mubr.f32.mxu0 0.0
      %307 = vmatmul.mubr.f32.gmra.mxu0 %v216
      %v308 = vpop.f32.mrf.mxu0
      %v309 = vadd.f32 %v204, %v308
      %v310 = vpop.f32.mrf.mxu0
      %v311 = vadd.f32 %v208, %v310
      %312 = vmatprep.mubr.f32.mxu0 0.0
      %313 = vmatmul.mubr.f32.gmra.mxu0 %v219
      %v314 = vpop.f32.mrf.mxu0
      %v315 = vadd.f32 %v204, %v314
      %v316 = vpop.f32.mrf.mxu0
      %v317 = vadd.f32 %v208, %v316
      %318 = vmatprep.mubr.f32.mxu0 0.0
      %319 = vmatmul.mubr.f32.gmra.mxu0 %v222
      %v320 = vpop.f32.mrf.mxu0
      %v321 = vadd.f32 %v204, %v320
      %v322 = vpop.f32.mrf.mxu0
      %v323 = vadd.f32 %v208, %v322
      %324 = vmatprep.mubr.f32.mxu0 0.0
      %325 = vmatmul.mubr.f32.gmra.mxu0 %v225
      %v326 = vpop.f32.mrf.mxu0
      %v327 = vadd.f32 %v204, %v326
      %v328 = vpop.f32.mrf.mxu0
      %v329 = vadd.f32 %v208, %v328
      %330 = vmatprep.mubr.f32.mxu0 0.0
      %331 = vmatmul.mubr.f32.gmra.mxu0 %v228
      %v332 = vpop.f32.mrf.mxu0
      %v333 = vadd.f32 %v204, %v332
      %v334 = vpop.f32.mrf.mxu0
      %v335 = vadd.f32 %v208, %v334
      %336 = vmatprep.mubr.f32.mxu0 0.0
      %337 = vmatmul.mubr.f32.gmra.mxu0 %v231
      %v338 = vpop.f32.mrf.mxu0
      %v339 = vadd.f32 %v204, %v338
      %v340 = vpop.f32.mrf.mxu0
      %v341 = vadd.f32 %v208, %v340
      %342 = vmatprep.mubr.f32.mxu0 0.0
      %343 = vmatmul.mubr.f32.gmra.mxu0 %v234
      %v344 = vpop.f32.mrf.mxu0
      %v345 = vadd.f32 %v204, %v344
      %v346 = vpop.f32.mrf.mxu0
      %v347 = vadd.f32 %v208, %v346
      %348 = vdwg.mxu0
      %v349 = vmax.f32 %v303, 0.0
      %v350 = vmax.f32 %v305, 0.0
      %v351 = vmax.f32 %v309, 0.0
      %v352 = vmax.f32 %v311, 0.0
      %v353 = vmax.f32 %v315, 0.0
      %v354 = vmax.f32 %v317, 0.0
      %v355 = vmax.f32 %v321, 0.0
      %v356 = vmax.f32 %v323, 0.0
      %v357 = vmax.f32 %v327, 0.0
      %v358 = vmax.f32 %v329, 0.0
      %v359 = vmax.f32 %v333, 0.0
      %v360 = vmax.f32 %v335, 0.0
      %v361 = vmax.f32 %v339, 0.0
      %v362 = vmax.f32 %v341, 0.0
      %v363 = vmax.f32 %v345, 0.0
      %v364 = vmax.f32 %v347, 0.0
      %v381 = vcombine.low %v349, %v350
      %v382 = vcombine.high %v349, %v350
      %v384 = vunpack.c.l.s4 1966171168
      %v385 = vunpack.c.0.s8 %v384
      %v386 = vlaneseq
      %v387 = vshrl.u32 %v386, 7
      %v388 = vsub.s32 %v385, %v387
      %v389 = vrot.slane %v381, %v388
      %v391 = vunpack.c.l.s4 1966171168
      %v392 = vunpack.c.0.s8 %v391
      %v393 = vlaneseq
      %v394 = vshrl.u32 %v393, 7
      %v395 = vsub.s32 %v392, %v394
      %v396 = vrot.slane %v382, %v395
      %v397 = vcombine.high %v389, %v389
      %v398 = vcombine.high %v396, %v396
      %v400 = vunpack.c.l.s4 1966171168
      %v401 = vunpack.c.0.s8 %v400
      %v402 = vlaneseq
      %v403 = vshrl.u32 %v402, 7
      %v404 = vsub.s32 %v401, %v403
      %v405 = vrot.slane %v389, %v404
      %v407 = vunpack.c.l.s4 1966171168
      %v408 = vunpack.c.0.s8 %v407
      %v409 = vlaneseq
      %v410 = vshrl.u32 %v409, 7
      %v411 = vsub.s32 %v408, %v410
      %v412 = vrot.slane %v396, %v411
      %v414 = vunpack.c.l.s4 1966171168
      %v415 = vunpack.c.0.s8 %v414
      %v416 = vlaneseq
      %v417 = vshrl.u32 %v416, 7
      %v418 = vsub.s32 %v415, %v417
      %v419 = vrot.slane %v397, %v418
      %v421 = vunpack.c.l.s4 1966171168
      %v422 = vunpack.c.0.s8 %v421
      %v423 = vlaneseq
      %v424 = vshrl.u32 %v423, 7
      %v425 = vsub.s32 %v422, %v424
      %v426 = vrot.slane %v398, %v425
      %v427 = vcombine.high %v405, %v405
      %v428 = vcombine.high %v412, %v412
      %v429 = vcombine.high %v419, %v419
      %v430 = vcombine.high %v426, %v426
      %v431 = vcombine.low %v351, %v352
      %v432 = vcombine.high %v351, %v352
      %v434 = vunpack.c.l.s4 1966171168
      %v435 = vunpack.c.0.s8 %v434
      %v436 = vlaneseq
      %v437 = vshrl.u32 %v436, 7
      %v438 = vsub.s32 %v435, %v437
      %v439 = vrot.slane %v431, %v438
      %v441 = vunpack.c.l.s4 1966171168
      %v442 = vunpack.c.0.s8 %v441
      %v443 = vlaneseq
      %v444 = vshrl.u32 %v443, 7
      %v445 = vsub.s32 %v442, %v444
      %v446 = vrot.slane %v432, %v445
      %v447 = vcombine.high %v439, %v439
      %v448 = vcombine.high %v446, %v446
      %v450 = vunpack.c.l.s4 1966171168
      %v451 = vunpack.c.0.s8 %v450
      %v452 = vlaneseq
      %v453 = vshrl.u32 %v452, 7
      %v454 = vsub.s32 %v451, %v453
      %v455 = vrot.slane %v439, %v454
      %v457 = vunpack.c.l.s4 1966171168
      %v458 = vunpack.c.0.s8 %v457
      %v459 = vlaneseq
      %v460 = vshrl.u32 %v459, 7
      %v461 = vsub.s32 %v458, %v460
      %v462 = vrot.slane %v446, %v461
      %v464 = vunpack.c.l.s4 1966171168
      %v465 = vunpack.c.0.s8 %v464
      %v466 = vlaneseq
      %v467 = vshrl.u32 %v466, 7
      %v468 = vsub.s32 %v465, %v467
      %v469 = vrot.slane %v447, %v468
      %v471 = vunpack.c.l.s4 1966171168
      %v472 = vunpack.c.0.s8 %v471
      %v473 = vlaneseq
      %v474 = vshrl.u32 %v473, 7
      %v475 = vsub.s32 %v472, %v474
      %v476 = vrot.slane %v448, %v475
      %v477 = vcombine.high %v455, %v455
      %v478 = vcombine.high %v462, %v462
      %v479 = vcombine.high %v469, %v469
      %v480 = vcombine.high %v476, %v476
      %v481 = vcombine.low %v353, %v354
      %v482 = vcombine.high %v353, %v354
      %v484 = vunpack.c.l.s4 1966171168
      %v485 = vunpack.c.0.s8 %v484
      %v486 = vlaneseq
      %v487 = vshrl.u32 %v486, 7
      %v488 = vsub.s32 %v485, %v487
      %v489 = vrot.slane %v481, %v488
      %v491 = vunpack.c.l.s4 1966171168
      %v492 = vunpack.c.0.s8 %v491
      %v493 = vlaneseq
      %v494 = vshrl.u32 %v493, 7
      %v495 = vsub.s32 %v492, %v494
      %v496 = vrot.slane %v482, %v495
      %v497 = vcombine.high %v489, %v489
      %v498 = vcombine.high %v496, %v496
      %v500 = vunpack.c.l.s4 1966171168
      %v501 = vunpack.c.0.s8 %v500
      %v502 = vlaneseq
      %v503 = vshrl.u32 %v502, 7
      %v504 = vsub.s32 %v501, %v503
      %v505 = vrot.slane %v489, %v504
      %v507 = vunpack.c.l.s4 1966171168
      %v508 = vunpack.c.0.s8 %v507
      %v509 = vlaneseq
      %v510 = vshrl.u32 %v509, 7
      %v511 = vsub.s32 %v508, %v510
      %v512 = vrot.slane %v496, %v511
      %v514 = vunpack.c.l.s4 1966171168
      %v515 = vunpack.c.0.s8 %v514
      %v516 = vlaneseq
      %v517 = vshrl.u32 %v516, 7
      %v518 = vsub.s32 %v515, %v517
      %v519 = vrot.slane %v497, %v518
      %v521 = vunpack.c.l.s4 1966171168
      %v522 = vunpack.c.0.s8 %v521
      %v523 = vlaneseq
      %v524 = vshrl.u32 %v523, 7
      %v525 = vsub.s32 %v522, %v524
      %v526 = vrot.slane %v498, %v525
      %v527 = vcombine.high %v505, %v505
      %v528 = vcombine.high %v512, %v512
      %v529 = vcombine.high %v519, %v519
      %v530 = vcombine.high %v526, %v526
      %v531 = vcombine.low %v355, %v356
      %v532 = vcombine.high %v355, %v356
      %v534 = vunpack.c.l.s4 1966171168
      %v535 = vunpack.c.0.s8 %v534
      %v536 = vlaneseq
      %v537 = vshrl.u32 %v536, 7
      %v538 = vsub.s32 %v535, %v537
      %v539 = vrot.slane %v531, %v538
      %v541 = vunpack.c.l.s4 1966171168
      %v542 = vunpack.c.0.s8 %v541
      %v543 = vlaneseq
      %v544 = vshrl.u32 %v543, 7
      %v545 = vsub.s32 %v542, %v544
      %v546 = vrot.slane %v532, %v545
      %v547 = vcombine.high %v539, %v539
      %v548 = vcombine.high %v546, %v546
      %v550 = vunpack.c.l.s4 1966171168
      %v551 = vunpack.c.0.s8 %v550
      %v552 = vlaneseq
      %v553 = vshrl.u32 %v552, 7
      %v554 = vsub.s32 %v551, %v553
      %v555 = vrot.slane %v539, %v554
      %v557 = vunpack.c.l.s4 1966171168
      %v558 = vunpack.c.0.s8 %v557
      %v559 = vlaneseq
      %v560 = vshrl.u32 %v559, 7
      %v561 = vsub.s32 %v558, %v560
      %v562 = vrot.slane %v546, %v561
      %v564 = vunpack.c.l.s4 1966171168
      %v565 = vunpack.c.0.s8 %v564
      %v566 = vlaneseq
      %v567 = vshrl.u32 %v566, 7
      %v568 = vsub.s32 %v565, %v567
      %v569 = vrot.slane %v547, %v568
      %v571 = vunpack.c.l.s4 1966171168
      %v572 = vunpack.c.0.s8 %v571
      %v573 = vlaneseq
      %v574 = vshrl.u32 %v573, 7
      %v575 = vsub.s32 %v572, %v574
      %v576 = vrot.slane %v548, %v575
      %v577 = vcombine.high %v555, %v555
      %v578 = vcombine.high %v562, %v562
      %v579 = vcombine.high %v569, %v569
      %v580 = vcombine.high %v576, %v576
      %v581 = vcombine.low %v357, %v358
      %v582 = vcombine.high %v357, %v358
      %v584 = vunpack.c.l.s4 1966171168
      %v585 = vunpack.c.0.s8 %v584
      %v586 = vlaneseq
      %v587 = vshrl.u32 %v586, 7
      %v588 = vsub.s32 %v585, %v587
      %v589 = vrot.slane %v581, %v588
      %v591 = vunpack.c.l.s4 1966171168
      %v592 = vunpack.c.0.s8 %v591
      %v593 = vlaneseq
      %v594 = vshrl.u32 %v593, 7
      %v595 = vsub.s32 %v592, %v594
      %v596 = vrot.slane %v582, %v595
      %v597 = vcombine.high %v589, %v589
      %v598 = vcombine.high %v596, %v596
      %v600 = vunpack.c.l.s4 1966171168
      %v601 = vunpack.c.0.s8 %v600
      %v602 = vlaneseq
      %v603 = vshrl.u32 %v602, 7
      %v604 = vsub.s32 %v601, %v603
      %v605 = vrot.slane %v589, %v604
      %v607 = vunpack.c.l.s4 1966171168
      %v608 = vunpack.c.0.s8 %v607
      %v609 = vlaneseq
      %v610 = vshrl.u32 %v609, 7
      %v611 = vsub.s32 %v608, %v610
      %v612 = vrot.slane %v596, %v611
      %v614 = vunpack.c.l.s4 1966171168
      %v615 = vunpack.c.0.s8 %v614
      %v616 = vlaneseq
      %v617 = vshrl.u32 %v616, 7
      %v618 = vsub.s32 %v615, %v617
      %v619 = vrot.slane %v597, %v618
      %v621 = vunpack.c.l.s4 1966171168
      %v622 = vunpack.c.0.s8 %v621
      %v623 = vlaneseq
      %v624 = vshrl.u32 %v623, 7
      %v625 = vsub.s32 %v622, %v624
      %v626 = vrot.slane %v598, %v625
      %v627 = vcombine.high %v605, %v605
      %v628 = vcombine.high %v612, %v612
      %v629 = vcombine.high %v619, %v619
      %v630 = vcombine.high %v626, %v626
      %v631 = vcombine.low %v359, %v360
      %v632 = vcombine.high %v359, %v360
      %v634 = vunpack.c.l.s4 1966171168
      %v635 = vunpack.c.0.s8 %v634
      %v636 = vlaneseq
      %v637 = vshrl.u32 %v636, 7
      %v638 = vsub.s32 %v635, %v637
      %v639 = vrot.slane %v631, %v638
      %v641 = vunpack.c.l.s4 1966171168
      %v642 = vunpack.c.0.s8 %v641
      %v643 = vlaneseq
      %v644 = vshrl.u32 %v643, 7
      %v645 = vsub.s32 %v642, %v644
      %v646 = vrot.slane %v632, %v645
      %v647 = vcombine.high %v639, %v639
      %v648 = vcombine.high %v646, %v646
      %v650 = vunpack.c.l.s4 1966171168
      %v651 = vunpack.c.0.s8 %v650
      %v652 = vlaneseq
      %v653 = vshrl.u32 %v652, 7
      %v654 = vsub.s32 %v651, %v653
      %v655 = vrot.slane %v639, %v654
      %v657 = vunpack.c.l.s4 1966171168
      %v658 = vunpack.c.0.s8 %v657
      %v659 = vlaneseq
      %v660 = vshrl.u32 %v659, 7
      %v661 = vsub.s32 %v658, %v660
      %v662 = vrot.slane %v646, %v661
      %v664 = vunpack.c.l.s4 1966171168
      %v665 = vunpack.c.0.s8 %v664
      %v666 = vlaneseq
      %v667 = vshrl.u32 %v666, 7
      %v668 = vsub.s32 %v665, %v667
      %v669 = vrot.slane %v647, %v668
      %v671 = vunpack.c.l.s4 1966171168
      %v672 = vunpack.c.0.s8 %v671
      %v673 = vlaneseq
      %v674 = vshrl.u32 %v673, 7
      %v675 = vsub.s32 %v672, %v674
      %v676 = vrot.slane %v648, %v675
      %v677 = vcombine.high %v655, %v655
      %v678 = vcombine.high %v662, %v662
      %v679 = vcombine.high %v669, %v669
      %v680 = vcombine.high %v676, %v676
      %v681 = vcombine.low %v361, %v362
      %v682 = vcombine.high %v361, %v362
      %v684 = vunpack.c.l.s4 1966171168
      %v685 = vunpack.c.0.s8 %v684
      %v686 = vlaneseq
      %v687 = vshrl.u32 %v686, 7
      %v688 = vsub.s32 %v685, %v687
      %v689 = vrot.slane %v681, %v688
      %v691 = vunpack.c.l.s4 1966171168
      %v692 = vunpack.c.0.s8 %v691
      %v693 = vlaneseq
      %v694 = vshrl.u32 %v693, 7
      %v695 = vsub.s32 %v692, %v694
      %v696 = vrot.slane %v682, %v695
      %v697 = vcombine.high %v689, %v689
      %v698 = vcombine.high %v696, %v696
      %v700 = vunpack.c.l.s4 1966171168
      %v701 = vunpack.c.0.s8 %v700
      %v702 = vlaneseq
      %v703 = vshrl.u32 %v702, 7
      %v704 = vsub.s32 %v701, %v703
      %v705 = vrot.slane %v689, %v704
      %v707 = vunpack.c.l.s4 1966171168
      %v708 = vunpack.c.0.s8 %v707
      %v709 = vlaneseq
      %v710 = vshrl.u32 %v709, 7
      %v711 = vsub.s32 %v708, %v710
      %v712 = vrot.slane %v696, %v711
      %v714 = vunpack.c.l.s4 1966171168
      %v715 = vunpack.c.0.s8 %v714
      %v716 = vlaneseq
      %v717 = vshrl.u32 %v716, 7
      %v718 = vsub.s32 %v715, %v717
      %v719 = vrot.slane %v697, %v718
      %v721 = vunpack.c.l.s4 1966171168
      %v722 = vunpack.c.0.s8 %v721
      %v723 = vlaneseq
      %v724 = vshrl.u32 %v723, 7
      %v725 = vsub.s32 %v722, %v724
      %v726 = vrot.slane %v698, %v725
      %v727 = vcombine.high %v705, %v705
      %v728 = vcombine.high %v712, %v712
      %v729 = vcombine.high %v719, %v719
      %v730 = vcombine.high %v726, %v726
      %v731 = vcombine.low %v363, %v364
      %v733 = vunpack.c.l.s4 1966171168
      %v734 = vunpack.c.0.s8 %v733
      %v735 = vlaneseq
      %v736 = vshrl.u32 %v735, 7
      %v737 = vsub.s32 %v734, %v736
      %v738 = vrot.slane %v731, %v737
      %v739 = vcombine.high %v738, %v738
      %v741 = vunpack.c.l.s4 1966171168
      %v742 = vunpack.c.0.s8 %v741
      %v743 = vlaneseq
      %v744 = vshrl.u32 %v743, 7
      %v745 = vsub.s32 %v742, %v744
      %v746 = vrot.slane %v738, %v745
      %v748 = vunpack.c.l.s4 1966171168
      %v749 = vunpack.c.0.s8 %v748
      %v750 = vlaneseq
      %v751 = vshrl.u32 %v750, 7
      %v752 = vsub.s32 %v749, %v751
      %v753 = vrot.slane %v739, %v752
      %v754 = vcombine.high %v746, %v746
      %v755 = vcombine.high %v753, %v753
      %v756 = vcombine.low %v405, %v419
      %v757 = vcombine.low %v427, %v429
      %v758 = vcombine.low %v412, %v426
      %v759 = vcombine.low %v428, %v430
      %v761 = vunpack.c.l.s4 1966171168
      %v762 = vunpack.c.0.s8 %v761
      %v763 = vlaneseq
      %v764 = vshrl.u32 %v763, 7
      %v765 = vsub.s32 %v762, %v764
      %v766 = vrot.slane %v756, %v765
      %v768 = vunpack.c.l.s4 1966171168
      %v769 = vunpack.c.0.s8 %v768
      %v770 = vlaneseq
      %v771 = vshrl.u32 %v770, 7
      %v772 = vsub.s32 %v769, %v771
      %v773 = vrot.slane %v757, %v772
      %v775 = vunpack.c.l.s4 1966171168
      %v776 = vunpack.c.0.s8 %v775
      %v777 = vlaneseq
      %v778 = vshrl.u32 %v777, 7
      %v779 = vsub.s32 %v776, %v778
      %v780 = vrot.slane %v758, %v779
      %v782 = vunpack.c.l.s4 1966171168
      %v783 = vunpack.c.0.s8 %v782
      %v784 = vlaneseq
      %v785 = vshrl.u32 %v784, 7
      %v786 = vsub.s32 %v783, %v785
      %v787 = vrot.slane %v759, %v786
      %v788 = vcombine.low %v766, %v773
      %v789 = vcombine.high %v766, %v773
      %v790 = vcombine.low %v780, %v787
      %v791 = vcombine.high %v780, %v787
      %v793 = vunpack.c.l.s4 1966171168
      %v794 = vunpack.c.0.s8 %v793
      %v795 = vlaneseq
      %v796 = vshrl.u32 %v795, 7
      %v797 = vsub.s32 %v794, %v796
      %v798 = vrot.slane %v788, %v797
      %v800 = vunpack.c.l.s4 1966171168
      %v801 = vunpack.c.0.s8 %v800
      %v802 = vlaneseq
      %v803 = vshrl.u32 %v802, 7
      %v804 = vsub.s32 %v801, %v803
      %v805 = vrot.slane %v789, %v804
      %v807 = vunpack.c.l.s4 1966171168
      %v808 = vunpack.c.0.s8 %v807
      %v809 = vlaneseq
      %v810 = vshrl.u32 %v809, 7
      %v811 = vsub.s32 %v808, %v810
      %v812 = vrot.slane %v790, %v811
      %v814 = vunpack.c.l.s4 1966171168
      %v815 = vunpack.c.0.s8 %v814
      %v816 = vlaneseq
      %v817 = vshrl.u32 %v816, 7
      %v818 = vsub.s32 %v815, %v817
      %v819 = vrot.slane %v791, %v818
      %v820 = vcombine.low %v798, %v812
      %v821 = vcombine.low %v805, %v819
      %v822 = vcombine.low %v455, %v469
      %v823 = vcombine.low %v477, %v479
      %v824 = vcombine.low %v462, %v476
      %v826 = vunpack.c.l.s4 1966171168
      %v827 = vunpack.c.0.s8 %v826
      %v828 = vlaneseq
      %v829 = vshrl.u32 %v828, 7
      %v830 = vsub.s32 %v827, %v829
      %v831 = vrot.slane %v822, %v830
      %v833 = vunpack.c.l.s4 1966171168
      %v834 = vunpack.c.0.s8 %v833
      %v835 = vlaneseq
      %v836 = vshrl.u32 %v835, 7
      %v837 = vsub.s32 %v834, %v836
      %v838 = vrot.slane %v823, %v837
      %v840 = vunpack.c.l.s4 1966171168
      %v841 = vunpack.c.0.s8 %v840
      %v842 = vlaneseq
      %v843 = vshrl.u32 %v842, 7
      %v844 = vsub.s32 %v841, %v843
      %v845 = vrot.slane %v824, %v844
      %v847 = vunpack.c.l.s4 1966171168
      %v848 = vunpack.c.0.s8 %v847
      %v849 = vlaneseq
      %v850 = vshrl.u32 %v849, 7
      %v851 = vsub.s32 %v848, %v850
      %v852 = vrot.slane %v478, %v851
      %v853 = vcombine.low %v831, %v838
      %v854 = vcombine.high %v831, %v838
      %v855 = vcombine.low %v845, %v852
      %v856 = vcombine.high %v845, %v852
      %v858 = vunpack.c.l.s4 1966171168
      %v859 = vunpack.c.0.s8 %v858
      %v860 = vlaneseq
      %v861 = vshrl.u32 %v860, 7
      %v862 = vsub.s32 %v859, %v861
      %v863 = vrot.slane %v853, %v862
      %v865 = vunpack.c.l.s4 1966171168
      %v866 = vunpack.c.0.s8 %v865
      %v867 = vlaneseq
      %v868 = vshrl.u32 %v867, 7
      %v869 = vsub.s32 %v866, %v868
      %v870 = vrot.slane %v854, %v869
      %v872 = vunpack.c.l.s4 1966171168
      %v873 = vunpack.c.0.s8 %v872
      %v874 = vlaneseq
      %v875 = vshrl.u32 %v874, 7
      %v876 = vsub.s32 %v873, %v875
      %v877 = vrot.slane %v855, %v876
      %v879 = vunpack.c.l.s4 1966171168
      %v880 = vunpack.c.0.s8 %v879
      %v881 = vlaneseq
      %v882 = vshrl.u32 %v881, 7
      %v883 = vsub.s32 %v880, %v882
      %v884 = vrot.slane %v856, %v883
      %v885 = vcombine.low %v863, %v877
      %v886 = vcombine.low %v870, %v884
      %v887 = vcombine.low %v480, %v505
      %v888 = vcombine.low %v519, %v527
      %v889 = vcombine.low %v529, %v512
      %v890 = vcombine.low %v526, %v528
      %v892 = vunpack.c.l.s4 1966171168
      %v893 = vunpack.c.0.s8 %v892
      %v894 = vlaneseq
      %v895 = vshrl.u32 %v894, 7
      %v896 = vsub.s32 %v893, %v895
      %v897 = vrot.slane %v887, %v896
      %v899 = vunpack.c.l.s4 1966171168
      %v900 = vunpack.c.0.s8 %v899
      %v901 = vlaneseq
      %v902 = vshrl.u32 %v901, 7
      %v903 = vsub.s32 %v900, %v902
      %v904 = vrot.slane %v888, %v903
      %v906 = vunpack.c.l.s4 1966171168
      %v907 = vunpack.c.0.s8 %v906
      %v908 = vlaneseq
      %v909 = vshrl.u32 %v908, 7
      %v910 = vsub.s32 %v907, %v909
      %v911 = vrot.slane %v889, %v910
      %v913 = vunpack.c.l.s4 1966171168
      %v914 = vunpack.c.0.s8 %v913
      %v915 = vlaneseq
      %v916 = vshrl.u32 %v915, 7
      %v917 = vsub.s32 %v914, %v916
      %v918 = vrot.slane %v890, %v917
      %v919 = vcombine.low %v897, %v904
      %v920 = vcombine.high %v897, %v904
      %v921 = vcombine.low %v911, %v918
      %v922 = vcombine.high %v911, %v918
      %v924 = vunpack.c.l.s4 1966171168
      %v925 = vunpack.c.0.s8 %v924
      %v926 = vlaneseq
      %v927 = vshrl.u32 %v926, 7
      %v928 = vsub.s32 %v925, %v927
      %v929 = vrot.slane %v919, %v928
      %v931 = vunpack.c.l.s4 1966171168
      %v932 = vunpack.c.0.s8 %v931
      %v933 = vlaneseq
      %v934 = vshrl.u32 %v933, 7
      %v935 = vsub.s32 %v932, %v934
      %v936 = vrot.slane %v920, %v935
      %v938 = vunpack.c.l.s4 1966171168
      %v939 = vunpack.c.0.s8 %v938
      %v940 = vlaneseq
      %v941 = vshrl.u32 %v940, 7
      %v942 = vsub.s32 %v939, %v941
      %v943 = vrot.slane %v921, %v942
      %v945 = vunpack.c.l.s4 1966171168
      %v946 = vunpack.c.0.s8 %v945
      %v947 = vlaneseq
      %v948 = vshrl.u32 %v947, 7
      %v949 = vsub.s32 %v946, %v948
      %v950 = vrot.slane %v922, %v949
      %v951 = vcombine.low %v929, %v943
      %v952 = vcombine.low %v936, %v950
      %v953 = vcombine.low %v530, %v555
      %v954 = vcombine.low %v569, %v577
      %v955 = vcombine.low %v579, %v562
      %v957 = vunpack.c.l.s4 1966171168
      %v958 = vunpack.c.0.s8 %v957
      %v959 = vlaneseq
      %v960 = vshrl.u32 %v959, 7
      %v961 = vsub.s32 %v958, %v960
      %v962 = vrot.slane %v953, %v961
      %v964 = vunpack.c.l.s4 1966171168
      %v965 = vunpack.c.0.s8 %v964
      %v966 = vlaneseq
      %v967 = vshrl.u32 %v966, 7
      %v968 = vsub.s32 %v965, %v967
      %v969 = vrot.slane %v954, %v968
      %v971 = vunpack.c.l.s4 1966171168
      %v972 = vunpack.c.0.s8 %v971
      %v973 = vlaneseq
      %v974 = vshrl.u32 %v973, 7
      %v975 = vsub.s32 %v972, %v974
      %v976 = vrot.slane %v955, %v975
      %v978 = vunpack.c.l.s4 1966171168
      %v979 = vunpack.c.0.s8 %v978
      %v980 = vlaneseq
      %v981 = vshrl.u32 %v980, 7
      %v982 = vsub.s32 %v979, %v981
      %v983 = vrot.slane %v576, %v982
      %v984 = vcombine.low %v962, %v969
      %v985 = vcombine.high %v962, %v969
      %v986 = vcombine.low %v976, %v983
      %v987 = vcombine.high %v976, %v983
      %v989 = vunpack.c.l.s4 1966171168
      %v990 = vunpack.c.0.s8 %v989
      %v991 = vlaneseq
      %v992 = vshrl.u32 %v991, 7
      %v993 = vsub.s32 %v990, %v992
      %v994 = vrot.slane %v984, %v993
      %v996 = vunpack.c.l.s4 1966171168
      %v997 = vunpack.c.0.s8 %v996
      %v998 = vlaneseq
      %v999 = vshrl.u32 %v998, 7
      %v1000 = vsub.s32 %v997, %v999
      %v1001 = vrot.slane %v985, %v1000
      %v1003 = vunpack.c.l.s4 1966171168
      %v1004 = vunpack.c.0.s8 %v1003
      %v1005 = vlaneseq
      %v1006 = vshrl.u32 %v1005, 7
      %v1007 = vsub.s32 %v1004, %v1006
      %v1008 = vrot.slane %v986, %v1007
      %v1010 = vunpack.c.l.s4 1966171168
      %v1011 = vunpack.c.0.s8 %v1010
      %v1012 = vlaneseq
      %v1013 = vshrl.u32 %v1012, 7
      %v1014 = vsub.s32 %v1011, %v1013
      %v1015 = vrot.slane %v987, %v1014
      %v1016 = vcombine.low %v994, %v1008
      %v1017 = vcombine.low %v1001, %v1015
      %v1018 = vcombine.low %v578, %v580
      %v1019 = vcombine.low %v605, %v619
      %v1020 = vcombine.low %v627, %v629
      %v1021 = vcombine.low %v612, %v626
      %v1023 = vunpack.c.l.s4 1966171168
      %v1024 = vunpack.c.0.s8 %v1023
      %v1025 = vlaneseq
      %v1026 = vshrl.u32 %v1025, 7
      %v1027 = vsub.s32 %v1024, %v1026
      %v1028 = vrot.slane %v1018, %v1027
      %v1030 = vunpack.c.l.s4 1966171168
      %v1031 = vunpack.c.0.s8 %v1030
      %v1032 = vlaneseq
      %v1033 = vshrl.u32 %v1032, 7
      %v1034 = vsub.s32 %v1031, %v1033
      %v1035 = vrot.slane %v1019, %v1034
      %v1037 = vunpack.c.l.s4 1966171168
      %v1038 = vunpack.c.0.s8 %v1037
      %v1039 = vlaneseq
      %v1040 = vshrl.u32 %v1039, 7
      %v1041 = vsub.s32 %v1038, %v1040
      %v1042 = vrot.slane %v1020, %v1041
      %v1044 = vunpack.c.l.s4 1966171168
      %v1045 = vunpack.c.0.s8 %v1044
      %v1046 = vlaneseq
      %v1047 = vshrl.u32 %v1046, 7
      %v1048 = vsub.s32 %v1045, %v1047
      %v1049 = vrot.slane %v1021, %v1048
      %v1050 = vcombine.low %v1028, %v1035
      %v1051 = vcombine.high %v1028, %v1035
      %v1052 = vcombine.low %v1042, %v1049
      %v1053 = vcombine.high %v1042, %v1049
      %v1055 = vunpack.c.l.s4 1966171168
      %v1056 = vunpack.c.0.s8 %v1055
      %v1057 = vlaneseq
      %v1058 = vshrl.u32 %v1057, 7
      %v1059 = vsub.s32 %v1056, %v1058
      %v1060 = vrot.slane %v1050, %v1059
      %v1062 = vunpack.c.l.s4 1966171168
      %v1063 = vunpack.c.0.s8 %v1062
      %v1064 = vlaneseq
      %v1065 = vshrl.u32 %v1064, 7
      %v1066 = vsub.s32 %v1063, %v1065
      %v1067 = vrot.slane %v1051, %v1066
      %v1069 = vunpack.c.l.s4 1966171168
      %v1070 = vunpack.c.0.s8 %v1069
      %v1071 = vlaneseq
      %v1072 = vshrl.u32 %v1071, 7
      %v1073 = vsub.s32 %v1070, %v1072
      %v1074 = vrot.slane %v1052, %v1073
      %v1076 = vunpack.c.l.s4 1966171168
      %v1077 = vunpack.c.0.s8 %v1076
      %v1078 = vlaneseq
      %v1079 = vshrl.u32 %v1078, 7
      %v1080 = vsub.s32 %v1077, %v1079
      %v1081 = vrot.slane %v1053, %v1080
      %v1082 = vcombine.low %v1060, %v1074
      %v1083 = vcombine.low %v1067, %v1081
      %v1084 = vcombine.low %v628, %v630
      %v1085 = vcombine.low %v655, %v669
      %v1086 = vcombine.low %v677, %v679
      %v1088 = vunpack.c.l.s4 1966171168
      %v1089 = vunpack.c.0.s8 %v1088
      %v1090 = vlaneseq
      %v1091 = vshrl.u32 %v1090, 7
      %v1092 = vsub.s32 %v1089, %v1091
      %v1093 = vrot.slane %v1084, %v1092
      %v1095 = vunpack.c.l.s4 1966171168
      %v1096 = vunpack.c.0.s8 %v1095
      %v1097 = vlaneseq
      %v1098 = vshrl.u32 %v1097, 7
      %v1099 = vsub.s32 %v1096, %v1098
      %v1100 = vrot.slane %v1085, %v1099
      %v1102 = vunpack.c.l.s4 1966171168
      %v1103 = vunpack.c.0.s8 %v1102
      %v1104 = vlaneseq
      %v1105 = vshrl.u32 %v1104, 7
      %v1106 = vsub.s32 %v1103, %v1105
      %v1107 = vrot.slane %v1086, %v1106
      %v1109 = vunpack.c.l.s4 1966171168
      %v1110 = vunpack.c.0.s8 %v1109
      %v1111 = vlaneseq
      %v1112 = vshrl.u32 %v1111, 7
      %v1113 = vsub.s32 %v1110, %v1112
      %v1114 = vrot.slane %v662, %v1113
      %v1115 = vcombine.low %v1093, %v1100
      %v1116 = vcombine.high %v1093, %v1100
      %v1117 = vcombine.low %v1107, %v1114
      %v1118 = vcombine.high %v1107, %v1114
      %v1120 = vunpack.c.l.s4 1966171168
      %v1121 = vunpack.c.0.s8 %v1120
      %v1122 = vlaneseq
      %v1123 = vshrl.u32 %v1122, 7
      %v1124 = vsub.s32 %v1121, %v1123
      %v1125 = vrot.slane %v1115, %v1124
      %v1127 = vunpack.c.l.s4 1966171168
      %v1128 = vunpack.c.0.s8 %v1127
      %v1129 = vlaneseq
      %v1130 = vshrl.u32 %v1129, 7
      %v1131 = vsub.s32 %v1128, %v1130
      %v1132 = vrot.slane %v1116, %v1131
      %v1134 = vunpack.c.l.s4 1966171168
      %v1135 = vunpack.c.0.s8 %v1134
      %v1136 = vlaneseq
      %v1137 = vshrl.u32 %v1136, 7
      %v1138 = vsub.s32 %v1135, %v1137
      %v1139 = vrot.slane %v1117, %v1138
      %v1141 = vunpack.c.l.s4 1966171168
      %v1142 = vunpack.c.0.s8 %v1141
      %v1143 = vlaneseq
      %v1144 = vshrl.u32 %v1143, 7
      %v1145 = vsub.s32 %v1142, %v1144
      %v1146 = vrot.slane %v1118, %v1145
      %v1147 = vcombine.low %v1125, %v1139
      %v1148 = vcombine.low %v1132, %v1146
      %v1149 = vcombine.low %v676, %v678
      %v1150 = vcombine.low %v680, %v705
      %v1151 = vcombine.low %v719, %v727
      %v1152 = vcombine.low %v729, %v712
      %v1154 = vunpack.c.l.s4 1966171168
      %v1155 = vunpack.c.0.s8 %v1154
      %v1156 = vlaneseq
      %v1157 = vshrl.u32 %v1156, 7
      %v1158 = vsub.s32 %v1155, %v1157
      %v1159 = vrot.slane %v1149, %v1158
      %v1161 = vunpack.c.l.s4 1966171168
      %v1162 = vunpack.c.0.s8 %v1161
      %v1163 = vlaneseq
      %v1164 = vshrl.u32 %v1163, 7
      %v1165 = vsub.s32 %v1162, %v1164
      %v1166 = vrot.slane %v1150, %v1165
      %v1168 = vunpack.c.l.s4 1966171168
      %v1169 = vunpack.c.0.s8 %v1168
      %v1170 = vlaneseq
      %v1171 = vshrl.u32 %v1170, 7
      %v1172 = vsub.s32 %v1169, %v1171
      %v1173 = vrot.slane %v1151, %v1172
      %v1175 = vunpack.c.l.s4 1966171168
      %v1176 = vunpack.c.0.s8 %v1175
      %v1177 = vlaneseq
      %v1178 = vshrl.u32 %v1177, 7
      %v1179 = vsub.s32 %v1176, %v1178
      %v1180 = vrot.slane %v1152, %v1179
      %v1181 = vcombine.low %v1159, %v1166
      %v1182 = vcombine.high %v1159, %v1166
      %v1183 = vcombine.low %v1173, %v1180
      %v1184 = vcombine.high %v1173, %v1180
      %v1186 = vunpack.c.l.s4 1966171168
      %v1187 = vunpack.c.0.s8 %v1186
      %v1188 = vlaneseq
      %v1189 = vshrl.u32 %v1188, 7
      %v1190 = vsub.s32 %v1187, %v1189
      %v1191 = vrot.slane %v1181, %v1190
      %v1193 = vunpack.c.l.s4 1966171168
      %v1194 = vunpack.c.0.s8 %v1193
      %v1195 = vlaneseq
      %v1196 = vshrl.u32 %v1195, 7
      %v1197 = vsub.s32 %v1194, %v1196
      %v1198 = vrot.slane %v1182, %v1197
      %v1200 = vunpack.c.l.s4 1966171168
      %v1201 = vunpack.c.0.s8 %v1200
      %v1202 = vlaneseq
      %v1203 = vshrl.u32 %v1202, 7
      %v1204 = vsub.s32 %v1201, %v1203
      %v1205 = vrot.slane %v1183, %v1204
      %v1207 = vunpack.c.l.s4 1966171168
      %v1208 = vunpack.c.0.s8 %v1207
      %v1209 = vlaneseq
      %v1210 = vshrl.u32 %v1209, 7
      %v1211 = vsub.s32 %v1208, %v1210
      %v1212 = vrot.slane %v1184, %v1211
      %v1213 = vcombine.low %v1191, %v1205
      %v1214 = vcombine.low %v1198, %v1212
      %v1215 = vcombine.low %v726, %v728
      %v1216 = vcombine.low %v730, %v746
      %v1217 = vcombine.low %v753, %v754
      %v1219 = vunpack.c.l.s4 1966171168
      %v1220 = vunpack.c.0.s8 %v1219
      %v1221 = vlaneseq
      %v1222 = vshrl.u32 %v1221, 7
      %v1223 = vsub.s32 %v1220, %v1222
      %v1224 = vrot.slane %v1215, %v1223
      %v1226 = vunpack.c.l.s4 1966171168
      %v1227 = vunpack.c.0.s8 %v1226
      %v1228 = vlaneseq
      %v1229 = vshrl.u32 %v1228, 7
      %v1230 = vsub.s32 %v1227, %v1229
      %v1231 = vrot.slane %v1216, %v1230
      %v1233 = vunpack.c.l.s4 1966171168
      %v1234 = vunpack.c.0.s8 %v1233
      %v1235 = vlaneseq
      %v1236 = vshrl.u32 %v1235, 7
      %v1237 = vsub.s32 %v1234, %v1236
      %v1238 = vrot.slane %v1217, %v1237
      %v1240 = vunpack.c.l.s4 1966171168
      %v1241 = vunpack.c.0.s8 %v1240
      %v1242 = vlaneseq
      %v1243 = vshrl.u32 %v1242, 7
      %v1244 = vsub.s32 %v1241, %v1243
      %v1245 = vrot.slane %v755, %v1244
      %v1246 = vcombine.low %v1224, %v1231
      %v1247 = vcombine.high %v1224, %v1231
      %v1248 = vcombine.low %v1238, %v1245
      %v1249 = vcombine.high %v1238, %v1245
      %v1251 = vunpack.c.l.s4 1966171168
      %v1252 = vunpack.c.0.s8 %v1251
      %v1253 = vlaneseq
      %v1254 = vshrl.u32 %v1253, 7
      %v1255 = vsub.s32 %v1252, %v1254
      %v1256 = vrot.slane %v1246, %v1255
      %v1258 = vunpack.c.l.s4 1966171168
      %v1259 = vunpack.c.0.s8 %v1258
      %v1260 = vlaneseq
      %v1261 = vshrl.u32 %v1260, 7
      %v1262 = vsub.s32 %v1259, %v1261
      %v1263 = vrot.slane %v1247, %v1262
      %v1265 = vunpack.c.l.s4 1966171168
      %v1266 = vunpack.c.0.s8 %v1265
      %v1267 = vlaneseq
      %v1268 = vshrl.u32 %v1267, 7
      %v1269 = vsub.s32 %v1266, %v1268
      %v1270 = vrot.slane %v1248, %v1269
      %v1272 = vunpack.c.l.s4 1966171168
      %v1273 = vunpack.c.0.s8 %v1272
      %v1274 = vlaneseq
      %v1275 = vshrl.u32 %v1274, 7
      %v1276 = vsub.s32 %v1273, %v1275
      %v1277 = vrot.slane %v1249, %v1276
      %v1278 = vcombine.low %v1256, %v1270
      %v1279 = vcombine.low %v1263, %v1277
      %vm1296 = vcmask 1046528
      %v1297 = vsel %vm1296, %v885, -inf
      %v1298 = vmax.f32 %v820, %v1297
      %v1299 = vrot.slane %v1298, 4
      %v1300 = vmax.f32 %v1298, %v1299
      %v1301 = vrot.slane %v1300, 2
      %v1302 = vmax.f32 %v1300, %v1301
      %v1303 = vrot.slane %v1302, 1
      %v1304 = vmax.f32 %v1302, %v1303
      %v1305 = vsel %vm1296, %v886, -inf
      %v1306 = vmax.f32 %v821, %v1305
      %v1307 = vrot.slane %v1306, 4
      %v1308 = vmax.f32 %v1306, %v1307
      %v1309 = vrot.slane %v1308, 2
      %v1310 = vmax.f32 %v1308, %v1309
      %v1311 = vrot.slane %v1310, 1
      %v1312 = vmax.f32 %v1310, %v1311
      %v1313 = vsel %vm1296, %v1016, -inf
      %v1314 = vmax.f32 %v951, %v1313
      %v1315 = vrot.slane %v1314, 4
      %v1316 = vmax.f32 %v1314, %v1315
      %v1317 = vrot.slane %v1316, 2
      %v1318 = vmax.f32 %v1316, %v1317
      %v1319 = vrot.slane %v1318, 1
      %v1320 = vmax.f32 %v1318, %v1319
      %v1321 = vsel %vm1296, %v1017, -inf
      %v1322 = vmax.f32 %v952, %v1321
      %v1323 = vrot.slane %v1322, 4
      %v1324 = vmax.f32 %v1322, %v1323
      %v1325 = vrot.slane %v1324, 2
      %v1326 = vmax.f32 %v1324, %v1325
      %v1327 = vrot.slane %v1326, 1
      %v1328 = vmax.f32 %v1326, %v1327
      %v1329 = vsel %vm1296, %v1147, -inf
      %v1330 = vmax.f32 %v1082, %v1329
      %v1331 = vrot.slane %v1330, 4
      %v1332 = vmax.f32 %v1330, %v1331
      %v1333 = vrot.slane %v1332, 2
      %v1334 = vmax.f32 %v1332, %v1333
      %v1335 = vrot.slane %v1334, 1
      %v1336 = vmax.f32 %v1334, %v1335
      %v1337 = vsel %vm1296, %v1148, -inf
      %v1338 = vmax.f32 %v1083, %v1337
      %v1339 = vrot.slane %v1338, 4
      %v1340 = vmax.f32 %v1338, %v1339
      %v1341 = vrot.slane %v1340, 2
      %v1342 = vmax.f32 %v1340, %v1341
      %v1343 = vrot.slane %v1342, 1
      %v1344 = vmax.f32 %v1342, %v1343
      %v1345 = vsel %vm1296, %v1278, -inf
      %v1346 = vmax.f32 %v1213, %v1345
      %v1347 = vrot.slane %v1346, 4
      %v1348 = vmax.f32 %v1346, %v1347
      %v1349 = vrot.slane %v1348, 2
      %v1350 = vmax.f32 %v1348, %v1349
      %v1351 = vrot.slane %v1350, 1
      %v1352 = vmax.f32 %v1350, %v1351
      %v1353 = vsel %vm1296, %v1279, -inf
      %v1354 = vmax.f32 %v1214, %v1353
      %v1355 = vrot.slane %v1354, 4
      %v1356 = vmax.f32 %v1354, %v1355
      %v1357 = vrot.slane %v1356, 2
      %v1358 = vmax.f32 %v1356, %v1357
      %v1359 = vrot.slane %v1358, 1
      %v1360 = vmax.f32 %v1358, %v1359
      %v1369 = vcombine.low %v1304, %v1312
      %v1370 = vcombine.low %v1320, %v1328
      %v1371 = vcombine.low %v1336, %v1344
      %v1372 = vcombine.low %v1352, %v1360
      %v1373 = vrot.slane %v1370, 7
      %vm1374 = vcmask 1041409
      %v1375 = vsel %vm1374, %v1373, %v1369
      %vm1376 = vcmask 1045509
      %v1377 = vsel %vm1376, %v1373, %v1375
      %v1378 = vrot.slane %v1371, 6
      %vm1379 = vcmask 1042434
      %v1380 = vsel %vm1379, %v1378, %v1377
      %vm1381 = vcmask 1046534
      %v1382 = vsel %vm1381, %v1378, %v1380
      %v1383 = vrot.slane %v1372, 5
      %vm1384 = vcmask 1043459
      %v1385 = vsel %vm1384, %v1383, %v1382
      %vm1386 = vcmask 1047559
      %v1387 = vsel %vm1386, %v1383, %v1385
      %1389 = vst [vmem:[%s170] sm:$0xff] %v1387
      %p1390 = scmp.lt.s32.totalorder %s14, 1
      %s1391 = scalar_select %p1390, %s14, 1
      %s1392 = smul.addr %s1391, 2
      %s1393 = smul.addr %s1392, 4
      %s1394 = scalar_lea.vmem %s3, %s1393
      // Predicated region
      $region33: #{tfcnn_forward.1} parent=31 // pred_check
        %p1395 = pneg %p100
      $region34: #{tfcnn_forward.1} parent=31 // pred_check_branch
        %1397 = sbr.rel (%p1395) target = $region36
      $region35: #{tfcnn_forward.1} parent=31 // pred_region
        _
      $region36: #{tfcnn_forward.1} parent=31 // pred_fallthru
        _
    $region32: #{tfcnn_forward.1} parent=5 // pred_fallthru
      _
    %p1398 = scmp.le.s32.totalorder 2, %s9
    // Predicated region
    $region37: #{tfcnn_forward.1} parent=5 // pred_check
      %p1399 = pneg %p1398
    $region38: #{tfcnn_forward.1} parent=5 // pred_check_branch
      %1401 = sbr.rel (%p1399) target = $region40
    $region39: #{tfcnn_forward.1} parent=5 // pred_region
      %s1402 = ssub.s32 %s9, 2
      // Predicated region
      $region41: #{tfcnn_forward.1} parent=39 // pred_check
        %p1403 = pneg %p106
      $region42: #{tfcnn_forward.1} parent=39 // pred_check_branch
        %1405 = sbr.rel (%p1403) target = $region44
      $region43: #{tfcnn_forward.1} parent=39 // pred_region
        %p1406 = scmp.lt.s32.totalorder %s15, 1
        %s1407 = scalar_select %p1406, %s15, 1
        %s1408 = smul.addr %s1407, 2
        %s1409 = smul.addr %s1408, 4
        %s1410 = scalar_lea.vmem %s3, %s1409
      $region44: #{tfcnn_forward.1} parent=39 // pred_fallthru
        _
    $region40: #{tfcnn_forward.1} parent=5 // pred_fallthru
      _
  $region6: #{tfcnn_forward.1} parent=0 // loop_footer
    %s13 = sadd.s32 1, %s9
  $region7: #{tfcnn_forward.1} parent=0 // loop_footer_branch
    %8 = sbr.rel target = $region3
  $region8: #{tfcnn_forward.1} parent=0 // loop_exit
    _

</llo_original>
